<compile_context>
chip_gen: v5e
topology: v5e:2x2
jax: 0.10.0
libtpu: 0.0.40
codegen_flags: <defaults>
</compile_context>

<pallas_src>
import functools

import jax
import jax.numpy as jnp
from jax.experimental import pallas as pl
from jax.experimental.pallas import tpu as pltpu


def _resb_kernel(x_ref, w_ref, p_ref, o_ref, *, seg_len, pad):
    # x_ref: (C, B*L)  lane-dense activations; B batch elements of length
    #                  seg_len == L concatenated along the lane axis.
    # w_ref: (K, C, C) BN-folded conv weight, w_ref[k] = (C_out, C_in).
    # p_ref: (C, 2)    col 0 = residual scale (s2), col 1 = combined shift.
    # o_ref: (C, B*L)
    C, NL = o_ref.shape
    K = w_ref.shape[0]

    x = x_ref[...].astype(jnp.float32)

    # Position of each lane inside its length-seg_len segment; used to mask
    # conv taps so the receptive field never crosses a batch boundary
    # (reproduces the per-batch zero "same" padding).
    l_idx = jax.lax.broadcasted_iota(jnp.int32, (C, NL), 1) % seg_len

    # Conv1d as K shifted (C_out x C_in) @ (C_in x B*L) matmuls.
    acc = jnp.zeros((C, NL), jnp.float32)
    for k in range(K):                      # K is small & static -> unrolled
        s = k - pad                         # tap offset along the length axis
        if s == 0:
            xs = x
        elif s > 0:
            xs = jnp.concatenate(
                [x[:, s:], jnp.zeros((C, s), jnp.float32)], axis=1)
            xs = jnp.where(l_idx + s < seg_len, xs, 0.0)
        else:
            xs = jnp.concatenate(
                [jnp.zeros((C, -s), jnp.float32), x[:, :s]], axis=1)
            xs = jnp.where(l_idx + s >= 0, xs, 0.0)
        acc = acc + jnp.dot(w_ref[k].astype(jnp.float32), xs,
                            preferred_element_type=jnp.float32)

    s2 = p_ref[:, 0:1].astype(jnp.float32)       # (C, 1) residual scale
    sh = p_ref[:, 1:2].astype(jnp.float32)       # (C, 1) combined shift
    out = acc + x * s2 + sh
    o_ref[...] = jnp.maximum(out, 0.0).astype(o_ref.dtype)


def resb_forward(x, w, bn1_params, bn2_params, *, eps=1e-5, batch_block=None):
    """Eval-mode ResB forward.

    x: (N, C, L) float32; w: (C_out=C, C_in=C, K) Conv1d weight (bias=False).
    bn*_params = (gamma, beta, running_mean, running_var), each shape (C,).
    """
    N, C, L = x.shape
    K = w.shape[-1]
    pad = (K - 1) // 2
    # TODO(synk): only odd K reproduces PyTorch same-length padding here.
    assert 2 * pad == K - 1, "kernel size must be odd for the residual add"

    def fold(bn):
        g, b, rm, rv = bn
        scale = g / jnp.sqrt(rv + eps)
        return scale, b - rm * scale

    s1, sh1 = fold(bn1_params)
    s2, sh2 = fold(bn2_params)

    # BN2(BN1(conv(x)) + x) = conv(x)*(s1*s2) + x*s2 + (sh1*s2 + sh2)
    w_eff = (w * (s1 * s2)[:, None, None]).transpose(2, 0, 1)      # (K, Co, Ci)
    w_eff = w_eff.astype(jnp.float32)
    params = jnp.stack([s2, sh1 * s2 + sh2], axis=1).astype(jnp.float32)  # (C, 2)

    if batch_block is None:
        batch_block = N            # single grid step at small N
    assert N % batch_block == 0
    lanes = batch_block * L        # lane width per grid step

    # Lane-dense layout: one (C, N*L) slab, batch-major along the lane axis.
    x_flat = jnp.transpose(x, (1, 0, 2)).reshape(C, N * L)

    out_flat = pl.pallas_call(
        functools.partial(_resb_kernel, seg_len=L, pad=pad),
        out_shape=jax.ShapeDtypeStruct((C, N * L), x.dtype),
        grid=(N // batch_block,),
        in_specs=[
            pl.BlockSpec((C, lanes), lambda i: (0, i)),        # activations
            pl.BlockSpec((K, C, C), lambda i: (0, 0, 0)),      # folded weight
            pl.BlockSpec((C, 2), lambda i: (0, 0)),            # scale / shift
        ],
        out_specs=pl.BlockSpec((C, lanes), lambda i: (0, i)),
        compiler_params=pltpu.CompilerParams(
            dimension_semantics=("parallel",)),
    )(x_flat, w_eff, params)

    return out_flat.reshape(C, N, L).transpose(1, 0, 2)


def _reference(x, w, bn1_params, bn2_params, *, eps=1e-5):
    """Pure-JAX reference (eval-mode ResB forward)."""
    K = w.shape[-1]
    pad = (K - 1) // 2
    conv = jax.lax.conv_general_dilated(
        x, w, window_strides=(1,), padding=[(pad, pad)],
        dimension_numbers=("NCW", "OIW", "NCW"))

    def bn(y, params):
        g, b, rm, rv = params
        return (y - rm[None, :, None]) / jnp.sqrt(rv[None, :, None] + eps) \
            * g[None, :, None] + b[None, :, None]

    out = bn(conv, bn1_params)
    out = out + x
    out = bn(out, bn2_params)
    return jnp.maximum(out, 0.0)


if __name__ == "__main__":
    # Small shapes consistent with the module: num_filters=4, kernel=3, pad=1.
    N, C, L, K = 2, 4, 16, 3

    key = jax.random.PRNGKey(0)
    kx, kw, *kb = jax.random.split(key, 10)

    x = jax.random.normal(kx, (N, C, L), dtype=jnp.float32)
    # Conv1d weight (out_channels, in_channels, kernel), bias=False.
    w = jax.random.normal(kw, (C, C, K), dtype=jnp.float32) / jnp.sqrt(C * K)

    def bn_params(k1, k2, k3, k4):
        return (jax.random.uniform(k1, (C,), minval=0.5, maxval=1.5),   # gamma
                0.1 * jax.random.normal(k2, (C,)),                      # beta
                0.1 * jax.random.normal(k3, (C,)),                      # run mean
                jax.random.uniform(k4, (C,), minval=0.5, maxval=1.5))   # run var

    bn1 = bn_params(*kb[:4])
    bn2 = bn_params(*kb[4:8])

    out = jax.block_until_ready(resb_forward(x, w, bn1, bn2))
    ref = _reference(x, w, bn1, bn2)

    assert out.shape == (N, C, L)
    err = jnp.max(jnp.abs(out - ref))
    assert jnp.allclose(out, ref, atol=3e-5, rtol=1e-4), f"max abs err {err}"

    print("KERNEL_OK")
</pallas_src>

<mosaic_0001>
module attributes {stable_mosaic.version = 11 : i64} {
  func.func @_resb_kernel(%arg0: i32, %arg1: memref<4x32xf32, #tpu.memory_space<vmem>>, %arg2: memref<3x4x4xf32, #tpu.memory_space<vmem>>, %arg3: memref<4x2xf32, #tpu.memory_space<vmem>>, %arg4: memref<4x32xf32, #tpu.memory_space<vmem>>) attributes {dimension_semantics = [#tpu.dimension_semantics<parallel>], iteration_bounds = array<i64: 1>, scalar_prefetch = 0 : i64, scratch_operands = 0 : i64, tpu.core_type = #tpu.core_type<tc>, window_params = [{transform_indices = @transform_0, window_bounds = array<i64: 4, 32>}, {pipeline_mode = #tpu.pipeline_mode<synchronous>, transform_indices = @transform_1, window_bounds = array<i64: 3, 4, 4>}, {pipeline_mode = #tpu.pipeline_mode<synchronous>, transform_indices = @transform_2, window_bounds = array<i64: 4, 2>}, {transform_indices = @transform_3, window_bounds = array<i64: 4, 32>}]} {
    %c0 = arith.constant 0 : index
    %c0_0 = arith.constant 0 : index
    %0 = vector.load %arg1[%c0, %c0_0] : memref<4x32xf32, #tpu.memory_space<vmem>>, vector<4x32xf32>
    %1 = tpu.iota {dimensions = array<i32: 1>} : vector<4x32xi32>
    %c16_i32 = arith.constant 16 : i32
    %c0_i32 = arith.constant 0 : i32
    %2 = arith.cmpi eq, %c16_i32, %c0_i32 : i32
    %c1_i32 = arith.constant 1 : i32
    %3 = arith.select %2, %c1_i32, %c16_i32 : i32
    %4 = vector.broadcast %3 : i32 to vector<4x32xi32>
    %5 = arith.remsi %1, %4 : vector<4x32xi32>
    %c0_i32_1 = arith.constant 0 : i32
    %6 = vector.broadcast %c0_i32_1 : i32 to vector<4x32xi32>
    %7 = arith.cmpi ne, %5, %6 : vector<4x32xi32>
    %c0_i32_2 = arith.constant 0 : i32
    %8 = vector.broadcast %c0_i32_2 : i32 to vector<4x32xi32>
    %9 = arith.cmpi slt, %5, %8 : vector<4x32xi32>
    %c0_i32_3 = arith.constant 0 : i32
    %10 = arith.cmpi slt, %3, %c0_i32_3 : i32
    %11 = vector.broadcast %10 : i1 to vector<4x32xi1>
    %12 = vector.broadcast %11 : vector<4x32xi1> to vector<4x32xi1>
    %13 = arith.xori %9, %12 : vector<4x32xi1>
    %14 = arith.andi %13, %7 : vector<4x32xi1>
    %15 = vector.broadcast %3 : i32 to vector<4x32xi32>
    %16 = arith.addi %5, %15 : vector<4x32xi32>
    %17 = arith.select %14, %16, %5 : vector<4x32xi1>, vector<4x32xi32>
    %cst = arith.constant 0.000000e+00 : f32
    %18 = vector.broadcast %cst : f32 to vector<4x32xf32>
    %cst_4 = arith.constant 0.000000e+00 : f32
    %19 = vector.broadcast %cst_4 : f32 to vector<4x1xf32>
    %20 = vector.extract_strided_slice %0 {offsets = [0, 0], sizes = [4, 31], strides = [1, 1]} : vector<4x32xf32> to vector<4x31xf32>
    %21 = tpu.concatenate %19, %20 in 1 : vector<4x1xf32>, vector<4x31xf32> -> vector<4x32xf32>
    %c-1_i32 = arith.constant -1 : i32
    %22 = vector.broadcast %c-1_i32 : i32 to vector<4x32xi32>
    %23 = arith.addi %17, %22 : vector<4x32xi32>
    %c0_i32_5 = arith.constant 0 : i32
    %24 = vector.broadcast %c0_i32_5 : i32 to vector<4x32xi32>
    %25 = arith.cmpi sge, %23, %24 : vector<4x32xi32>
    %cst_6 = arith.constant 0.000000e+00 : f32
    %26 = vector.broadcast %cst_6 : f32 to vector<4x32xf32>
    %27 = arith.select %25, %21, %26 : vector<4x32xi1>, vector<4x32xf32>
    %c0_7 = arith.constant 0 : index
    %c0_8 = arith.constant 0 : index
    %c0_9 = arith.constant 0 : index
    %28 = vector.load %arg2[%c0_7, %c0_8, %c0_9] : memref<3x4x4xf32, #tpu.memory_space<vmem>>, vector<1x4x4xf32>
    %29 = vector.shape_cast %28 : vector<1x4x4xf32> to vector<4x4xf32>
    %cst_10 = arith.constant dense<0.000000e+00> : vector<4x32xf32>
    %30 = tpu.matmul %29, %27, %cst_10 {dimension_numbers = #tpu.dot_dimension_numbers<[1], [0], [0], [1], [0, 0, 1, 1], [], []>} : vector<4x4xf32>, vector<4x32xf32>, vector<4x32xf32> -> vector<4x32xf32>
    %31 = arith.addf %18, %30 : vector<4x32xf32>
    %c1 = arith.constant 1 : index
    %c0_11 = arith.constant 0 : index
    %c0_12 = arith.constant 0 : index
    %32 = vector.load %arg2[%c1, %c0_11, %c0_12] : memref<3x4x4xf32, #tpu.memory_space<vmem>>, vector<1x4x4xf32>
    %33 = vector.shape_cast %32 : vector<1x4x4xf32> to vector<4x4xf32>
    %cst_13 = arith.constant dense<0.000000e+00> : vector<4x32xf32>
    %34 = tpu.matmul %33, %0, %cst_13 {dimension_numbers = #tpu.dot_dimension_numbers<[1], [0], [0], [1], [0, 0, 1, 1], [], []>} : vector<4x4xf32>, vector<4x32xf32>, vector<4x32xf32> -> vector<4x32xf32>
    %35 = arith.addf %31, %34 : vector<4x32xf32>
    %36 = vector.extract_strided_slice %0 {offsets = [0, 1], sizes = [4, 31], strides = [1, 1]} : vector<4x32xf32> to vector<4x31xf32>
    %cst_14 = arith.constant 0.000000e+00 : f32
    %37 = vector.broadcast %cst_14 : f32 to vector<4x1xf32>
    %38 = tpu.concatenate %36, %37 in 1 : vector<4x31xf32>, vector<4x1xf32> -> vector<4x32xf32>
    %c1_i32_15 = arith.constant 1 : i32
    %39 = vector.broadcast %c1_i32_15 : i32 to vector<4x32xi32>
    %40 = arith.addi %17, %39 : vector<4x32xi32>
    %c16_i32_16 = arith.constant 16 : i32
    %41 = vector.broadcast %c16_i32_16 : i32 to vector<4x32xi32>
    %42 = arith.cmpi slt, %40, %41 : vector<4x32xi32>
    %cst_17 = arith.constant 0.000000e+00 : f32
    %43 = vector.broadcast %cst_17 : f32 to vector<4x32xf32>
    %44 = arith.select %42, %38, %43 : vector<4x32xi1>, vector<4x32xf32>
    %c2 = arith.constant 2 : index
    %c0_18 = arith.constant 0 : index
    %c0_19 = arith.constant 0 : index
    %45 = vector.load %arg2[%c2, %c0_18, %c0_19] : memref<3x4x4xf32, #tpu.memory_space<vmem>>, vector<1x4x4xf32>
    %46 = vector.shape_cast %45 : vector<1x4x4xf32> to vector<4x4xf32>
    %cst_20 = arith.constant dense<0.000000e+00> : vector<4x32xf32>
    %47 = tpu.matmul %46, %44, %cst_20 {dimension_numbers = #tpu.dot_dimension_numbers<[1], [0], [0], [1], [0, 0, 1, 1], [], []>} : vector<4x4xf32>, vector<4x32xf32>, vector<4x32xf32> -> vector<4x32xf32>
    %48 = arith.addf %35, %47 : vector<4x32xf32>
    %c0_21 = arith.constant 0 : index
    %c0_22 = arith.constant 0 : index
    %49 = vector.load %arg3[%c0_21, %c0_22] : memref<4x2xf32, #tpu.memory_space<vmem>>, vector<4x1xf32>
    %c0_23 = arith.constant 0 : index
    %c1_24 = arith.constant 1 : index
    %50 = vector.load %arg3[%c0_23, %c1_24] : memref<4x2xf32, #tpu.memory_space<vmem>>, vector<4x1xf32>
    %51 = vector.broadcast %49 : vector<4x1xf32> to vector<4x32xf32>
    %52 = arith.mulf %0, %51 : vector<4x32xf32>
    %53 = arith.addf %48, %52 : vector<4x32xf32>
    %54 = vector.broadcast %50 : vector<4x1xf32> to vector<4x32xf32>
    %55 = arith.addf %53, %54 : vector<4x32xf32>
    %cst_25 = arith.constant 0.000000e+00 : f32
    %56 = vector.broadcast %cst_25 : f32 to vector<4x32xf32>
    %57 = arith.maximumf %55, %56 : vector<4x32xf32>
    %c0_26 = arith.constant 0 : index
    %c0_27 = arith.constant 0 : index
    %58 = vector.load %arg4[%c0_26, %c0_27] : memref<4x32xf32, #tpu.memory_space<vmem>>, vector<4x32xf32>
    tpu.vector_store %arg4[%c0_26, %c0_27], %57 {strides = array<i32>} : memref<4x32xf32, #tpu.memory_space<vmem>>, vector<4x32xf32>,
    return
  }
  func.func @transform_0(%arg0: i32) -> (i32, i32) {
    %c0_i32 = arith.constant 0 : i32
    %c0_i32_0 = arith.constant 0 : i32
    return %c0_i32, %arg0 : i32, i32
  }
  func.func @transform_1(%arg0: i32) -> (i32, i32, i32) {
    %c0_i32 = arith.constant 0 : i32
    %c0_i32_0 = arith.constant 0 : i32
    %c0_i32_1 = arith.constant 0 : i32
    %c0_i32_2 = arith.constant 0 : i32
    return %c0_i32, %c0_i32_0, %c0_i32_1 : i32, i32, i32
  }
  func.func @transform_2(%arg0: i32) -> (i32, i32) {
    %c0_i32 = arith.constant 0 : i32
    %c0_i32_0 = arith.constant 0 : i32
    %c0_i32_1 = arith.constant 0 : i32
    return %c0_i32, %c0_i32_0 : i32, i32
  }
  func.func @transform_3(%arg0: i32) -> (i32, i32) {
    %c0_i32 = arith.constant 0 : i32
    %c0_i32_0 = arith.constant 0 : i32
    return %c0_i32, %arg0 : i32, i32
  }
}

</mosaic_0001>

<llo_original>
// kernel: tpu_custom_call.1
$region0: #{tpu_custom_call.1}
  #allocation0 [shape = 'u32[]', space=smem, size = 0x4, offset = 0x4, fixed_abs, tag = 'smem constant byte address 0x4 - core index']
  #allocation1 [shape = 'u32[72,128]{1,0:T(1,128)}', space=vmem, size = 0x9000, scoped, tag = 'internal scratch']
  %s0 = inlined_call_operand.vmem [shape: f32[4,32], index: 0, kind: input, shape index: {}]
  %s1 = inlined_call_operand.hbm [shape: f32[3,4,4], index: 1, kind: input, shape index: {}]
  %s2 = inlined_call_operand.vmem [shape: f32[4,2], index: 2, kind: input, shape index: {}]
  %s3 = inlined_call_operand.hbm [shape: f32[4,32], index: 3, kind: output, shape index: {}]
  %s4 = sld [smem:[#allocation0]]
  $region26: #{tpu_custom_call.1} parent=0
    _
  %s6 = ssub.s32 1, %s4
  %s7 = scalar_select 0, %s6, %s4
  $region1: #{tpu_custom_call.1} parent=0
    #allocation2 [shape = 'u8[6144]{0}', space=vmem, size = 0x1800, scoped, tag = 'input window, operand 1, single buffered']
    #allocation3 [shape = 's32[1]{0}', space=sflag, size = 0x4, scoped, tag = 'scoped memory for tpu_custom_call.1']
    #allocation4 [shape = 's32[1]{0}', space=sflag, size = 0x4, scoped, tag = 'scoped memory for tpu_custom_call.1']
    #allocation5 [shape = 'u8[2048]{0}', space=vmem, size = 0x800, scoped, tag = 'output window, operand 0, single buffered']
    %8 = vsyncpa [#allocation3], 0
    %9 = vsyncpa [#allocation4], 0
    // Predicated region
    $region2: #{tpu_custom_call.1} parent=1 // pred_check
      _
    $region3: #{tpu_custom_call.1} parent=1 // pred_check_branch
      %11 = sbr.rel (0) target = $region5
    $region4: #{tpu_custom_call.1} parent=1 // pred_region
      _
    $region5: #{tpu_custom_call.1} parent=1 // pred_fallthru
      _
    // Predicated region
    $region6: #{tpu_custom_call.1} parent=1 // pred_check
      _
    $region7: #{tpu_custom_call.1} parent=1 // pred_check_branch
      %13 = sbr.rel (0) target = $region9
    $region8: #{tpu_custom_call.1} parent=1 // pred_region
      %15 = vsyncadd [#allocation3], 0
      %s16 = sshll.u32 %s1, 4
      %s17 = int_to_ptr.hbm [resolvable:$true] %s16
      %s18 = sshll.u32 [#allocation2], 4
      %s19 = int_to_ptr.vmem [resolvable:$true] %s18
      %24 = dma.hbm_to_vmem [thread:$0]  %s17, 192, %s19, [#allocation3], 64, 64, 4
    $region9: #{tpu_custom_call.1} parent=1 // pred_fallthru
      _
    // Predicated region
    $region10: #{tpu_custom_call.1} parent=1 // pred_check
      _
    $region11: #{tpu_custom_call.1} parent=1 // pred_check_branch
      %26 = sbr.rel (0) target = $region13
    $region12: #{tpu_custom_call.1} parent=1 // pred_region
      _
    $region13: #{tpu_custom_call.1} parent=1 // pred_fallthru
      _
    // Predicated region
    $region14: #{tpu_custom_call.1} parent=1 // pred_check
      _
    $region15: #{tpu_custom_call.1} parent=1 // pred_check_branch
      %28 = sbr.rel (0) target = $region17
    $region16: #{tpu_custom_call.1} parent=1 // pred_region
      %30 = dma.done [#allocation3], 192
    $region17: #{tpu_custom_call.1} parent=1 // pred_fallthru
      _
    %v31 = vld [vmem:[%s0] sm:$0xf]
    %v32 = vlaneseq
    %v33 = vand.u32 %v32, 127
    %vm34 = vcmp.lt.s32.totalorder %v33, 0
    %v35 = vsub.s32 0, %v33
    %v36 = vsel %vm34, %v35, %v33
    %v37 = vshrl.u32 %v36, 4
    %v38 = vand.u32 %v36, 15
    %v39 = vsub.s32 0, %v38
    %v40 = vsel %vm34, %v39, %v38
    %vm41 = vcmp.ne.s32.totalorder %v40, 0
    %vm42 = vcmp.lt.s32.totalorder %v40, 0
    %vm43 = vmand %vm42, %vm41
    %v44 = vadd.s32 %v40, 16
    %v45 = vsel %vm43, %v44, %v40
    %47 = vrot.lane.b32.xlu0 %v31, 1
    %v48 = vpop.permute.xlu0 %47
    %vm50 = vcmask 7168
    %v51 = vsel %vm50, 0.0, %v48
    %v52 = vadd.s32 %v45, 4294967295
    %vm53 = vcmp.ge.s32.totalorder %v52, 0
    %v54 = vsel %vm53, %v51, 0.0
    %v55 = vld [vmem:[#allocation2] sm:$0xf]
    %s56 = scalar_lea.vmem [#allocation2], 4
    %v57 = vld [vmem:[%s56] sm:$0xf]
    %vm58 = vcmask 31744
    %v60 = vsel %vm58, %v57, 0
    %vm62 = vcmask 1043456
    %v63 = vsel %vm62, %v31, 0
    %65 = vmatpush.msra.mxu0 0.0
    %66 = vmatpush.msra.mxu0 0.0
    %67 = vmatpush.msra.mxu0 0.0
    %68 = vmatpush.msra.mxu0 0.0
    %69 = vmatpush.msra.mxu0 0.0
    %70 = vmatpush.msra.mxu0 0.0
    %71 = vmatpush.msra.mxu0 0.0
    %72 = vmatpush.msra.mxu0 0.0
    %73 = vmatpush.msra.mxu0 0.0
    %74 = vmatpush.msra.mxu0 0.0
    %75 = vmatpush.msra.mxu0 0.0
    %76 = vmatpush.msra.mxu0 0.0
    %77 = vmatpush.msra.mxu0 0.0
    %78 = vmatpush.msra.mxu0 0.0
    %79 = vmatpush.msra.mxu0 0.0
    %80 = vmatpush.msra.mxu0 %v63
    %81 = vmatmul.f32.gmra.mxu0 %v60
    %v82 = vpop.f32.mrf.mxu0
    %v83 = vadd.f32 0.0, %v82
    %84 = vdwg.mxu0
    %v86 = vsel %vm58, %v55, 0
    %v89 = vsel %vm62, %v54, 0
    %91 = vmatpush.msra.mxu0 0.0
    %92 = vmatpush.msra.mxu0 0.0
    %93 = vmatpush.msra.mxu0 0.0
    %94 = vmatpush.msra.mxu0 0.0
    %95 = vmatpush.msra.mxu0 0.0
    %96 = vmatpush.msra.mxu0 0.0
    %97 = vmatpush.msra.mxu0 0.0
    %98 = vmatpush.msra.mxu0 0.0
    %99 = vmatpush.msra.mxu0 0.0
    %100 = vmatpush.msra.mxu0 0.0
    %101 = vmatpush.msra.mxu0 0.0
    %102 = vmatpush.msra.mxu0 0.0
    %103 = vmatpush.msra.mxu0 0.0
    %104 = vmatpush.msra.mxu0 0.0
    %105 = vmatpush.msra.mxu0 0.0
    %106 = vmatpush.msra.mxu0 %v89
    %107 = vmatmul.f32.gmra.mxu0 %v86
    %v108 = vpop.f32.mrf.mxu0
    %v109 = vadd.f32 %v83, %v108
    %110 = vdwg.mxu0
    %111 = vrot.lane.b32.xlu0 %v31, 127
    %v112 = vpop.permute.xlu0 %111
    %vm114 = vcmask 252928
    %v115 = vsel %vm114, %v112, 0.0
    %v116 = vadd.s32 %v45, 1
    %vm117 = vcmp.lt.s32.totalorder %v116, 16
    %v118 = vsel %vm117, %v115, 0.0
    %s119 = scalar_lea.vmem [#allocation2], 8
    %v120 = vld [vmem:[%s119] sm:$0xf]
    %v122 = vsel %vm58, %v120, 0
    %v125 = vsel %vm62, %v118, 0
    %127 = vmatpush.msra.mxu0 0.0
    %128 = vmatpush.msra.mxu0 0.0
    %129 = vmatpush.msra.mxu0 0.0
    %130 = vmatpush.msra.mxu0 0.0
    %131 = vmatpush.msra.mxu0 0.0
    %132 = vmatpush.msra.mxu0 0.0
    %133 = vmatpush.msra.mxu0 0.0
    %134 = vmatpush.msra.mxu0 0.0
    %135 = vmatpush.msra.mxu0 0.0
    %136 = vmatpush.msra.mxu0 0.0
    %137 = vmatpush.msra.mxu0 0.0
    %138 = vmatpush.msra.mxu0 0.0
    %139 = vmatpush.msra.mxu0 0.0
    %140 = vmatpush.msra.mxu0 0.0
    %141 = vmatpush.msra.mxu0 0.0
    %142 = vmatpush.msra.mxu0 %v125
    %143 = vmatmul.f32.gmra.mxu0 %v122
    %v144 = vpop.f32.mrf.mxu0
    %v145 = vadd.f32 0.0, %v144
    %146 = vdwg.mxu0
    %v147 = vadd.f32 %v109, %v145
    %v148 = vld [vmem:[%s2] sm:$0xf]
    %150 = vset.pattern.permute.xlu0 0
    %151 = vperm.xlu0 %150, %v148
    %v152 = vpop.permute.xlu0 %151
    %v154 = vmul.f32 %v31, %v152
    %v155 = vadd.f32 %v147, %v154
    %156 = vset.pattern.permute.xlu0 1
    %157 = vperm.xlu0 %156, %v148
    %v158 = vpop.permute.xlu0 %157
    %v160 = vadd.f32 %v155, %v158
    %v161 = vmax.f32 %v160, 0.0
    %vm162 = vcmask 257024
    %163 = vst.msk [vmem:[#allocation5] sm:$0xf] %vm162, %v161
    // Predicated region
    $region18: #{tpu_custom_call.1} parent=1 // pred_check
      _
    $region19: #{tpu_custom_call.1} parent=1 // pred_check_branch
      %165 = sbr.rel (0) target = $region21
    $region20: #{tpu_custom_call.1} parent=1 // pred_region
      %167 = vsyncadd [#allocation4], 0
      %s169 = sshll.u32 [#allocation5], 4
      %s170 = int_to_ptr.vmem [resolvable:$true] %s169
      %s171 = sshll.u32 %s3, 4
      %s172 = int_to_ptr.hbm [resolvable:$true] %s171
      %174 = dma.vmem_to_hbm [thread:$0]  %s170, 64, %s172, [#allocation4]
    $region21: #{tpu_custom_call.1} parent=1 // pred_fallthru
      _
    // Predicated region
    $region22: #{tpu_custom_call.1} parent=1 // pred_check
      _
    $region23: #{tpu_custom_call.1} parent=1 // pred_check_branch
      %176 = sbr.rel (0) target = $region25
    $region24: #{tpu_custom_call.1} parent=1 // pred_region
      %178 = dma.done [#allocation4], 64
    $region25: #{tpu_custom_call.1} parent=1 // pred_fallthru
      _
    %179 = vsyncpa [#allocation3], 1
    %180 = vsyncpa [#allocation4], 1

</llo_original>
